<compile_context>
chip_gen: v6e
topology: v6e:2x2x1
jax: 0.10.0
libtpu: 0.0.40
codegen_flags: <defaults>
</compile_context>

<pallas_src>
import jax
import jax.numpy as jnp
from jax.experimental import pallas as pl
from jax.experimental.pallas import tpu as pltpu


def mean_pool_kernel(h_ref, m_ref, inv_ref, o_ref, acc_ref):
    # h_ref:   (TB, TS, TH) input dtype
    # m_ref:   (TB, TS, 1)  f32 mask (S on sublanes, broadcast over H lanes)
    # inv_ref: (TB, 1)      f32 precomputed 1/clamp(sum(mask), 1e-9)
    # o_ref:   (TB, TH)     f32 output
    # acc_ref: (TB, TH)     f32 accumulator (VMEM scratch)
    k = pl.program_id(2)

    @pl.when(k == 0)
    def _init():
        acc_ref[...] = jnp.zeros_like(acc_ref)

    # Masked partial sum over this S tile; the multiply promotes per-vreg to
    # f32 (no staged whole-tile cast) and the reduction accumulates in f32.
    acc_ref[...] += jnp.sum(h_ref[...] * m_ref[...], axis=1, dtype=jnp.float32)

    @pl.when(k == pl.num_programs(2) - 1)
    def _finalize():
        o_ref[...] = (acc_ref[...] * inv_ref[...]).astype(o_ref.dtype)


def _pick_tile(dim, align, cap):
    """Largest divisor of `dim` that is a multiple of `align` and <= cap.

    Falls back to the full `dim` if it is not a multiple of `align`
    (full-extent blocks are always legal)."""
    if dim % align != 0:
        return dim
    best = align
    t = align
    limit = min(dim, max(align, cap))
    while t <= limit:
        if dim % t == 0:
            best = t
        t += align
    return best


def mean_pooling(last_hidden_state, attention_mask, *, tb=None, th=None, ts=None):
    """Masked mean pooling.

    last_hidden_state: [B, S, H] float array
    attention_mask:    [B, S] (any numeric/bool dtype)
    returns:           [B, H] float32 (matches the torch .float() promotion)
    """
    B, S, H = last_hidden_state.shape
    assert attention_mask.shape == (B, S)

    # --- tile selection -----------------------------------------------------
    if tb is None:
        tb = 8 if B % 8 == 0 else B                      # sublane-dense output
    if th is None:
        th = _pick_tile(H, 128, 512)                     # 128-lane aligned
    if ts is None:
        itemsize = jnp.dtype(last_hidden_state.dtype).itemsize
        budget = 2 * 1024 * 1024                         # per h block (double-buffered)
        cap = max(8, budget // max(1, tb * th * itemsize))
        ts = _pick_tile(S, 8, cap)

    assert B % tb == 0 and S % ts == 0 and H % th == 0, (B, S, H, tb, ts, th)

    # --- cheap host-side prep (glue, negligible HBM traffic) ----------------
    mask_f32 = attention_mask.astype(jnp.float32)
    mask3 = mask_f32.reshape(B, S, 1)                    # S on sublanes
    inv_denom = 1.0 / jnp.maximum(
        mask_f32.sum(axis=1, keepdims=True), 1e-9)       # [B, 1]

    grid = (B // tb, H // th, S // ts)                   # reduction axis last

    return pl.pallas_call(
        mean_pool_kernel,
        out_shape=jax.ShapeDtypeStruct((B, H), jnp.float32),
        grid_spec=pltpu.PrefetchScalarGridSpec(
            num_scalar_prefetch=0,
            grid=grid,
            in_specs=[
                pl.BlockSpec((tb, ts, th), lambda b, j, k: (b, k, j)),
                pl.BlockSpec((tb, ts, 1), lambda b, j, k: (b, k, 0)),
                pl.BlockSpec((tb, 1), lambda b, j, k: (b, 0)),
            ],
            out_specs=pl.BlockSpec((tb, th), lambda b, j, k: (b, j)),
            scratch_shapes=[pltpu.VMEM((tb, th), jnp.float32)],
        ),
        compiler_params=pltpu.CompilerParams(
            dimension_semantics=("parallel", "parallel", "arbitrary"),
        ),
    )(last_hidden_state, mask3, inv_denom)


def mean_pooling_ref(last_hidden_state, attention_mask):
    mask = attention_mask.astype(jnp.float32)[:, :, None]
    summed = jnp.sum(last_hidden_state.astype(jnp.float32) * mask, axis=1)
    denom = jnp.maximum(jnp.sum(mask, axis=1), 1e-9)
    return summed / denom


if __name__ == "__main__":
    key = jax.random.PRNGKey(0)
    k1, k2, k3, k4 = jax.random.split(key, 4)

    # Test 1: small shapes implied by the module's forward (B, S, H).
    B, S, H = 2, 8, 32
    h1 = jax.random.normal(k1, (B, S, H), dtype=jnp.float32)
    m1 = (jax.random.uniform(k2, (B, S)) > 0.3).astype(jnp.int32)

    out1 = jax.block_until_ready(mean_pooling(h1, m1))
    ref1 = mean_pooling_ref(h1, m1)
    assert out1.shape == (B, H)
    assert jnp.allclose(out1, ref1, atol=1e-5, rtol=1e-5), "mismatch (test 1)"

    # Test 2: exercise the tiled path (8-row batch blocks, H tiling, S-reduction
    # grid axis with the accumulator pattern) at still-small shapes.
    B2, S2, H2 = 8, 64, 256
    h2 = jax.random.normal(k3, (B2, S2, H2), dtype=jnp.float32)
    m2 = (jax.random.uniform(k4, (B2, S2)) > 0.5).astype(jnp.int32)

    out2 = jax.block_until_ready(mean_pooling(h2, m2, th=128, ts=16))
    ref2 = mean_pooling_ref(h2, m2)
    assert out2.shape == (B2, H2)
    assert jnp.allclose(out2, ref2, atol=1e-5, rtol=1e-5), "mismatch (test 2)"

    print("KERNEL_OK")
</pallas_src>

<mosaic_0001>
module attributes {stable_mosaic.version = 11 : i64} {
  func.func @mean_pool_kernel(%arg0: i32, %arg1: i32, %arg2: i32, %arg3: memref<2x8x32xf32, #tpu.memory_space<vmem>>, %arg4: memref<2x8x1xf32, #tpu.memory_space<vmem>>, %arg5: memref<2x1xf32, #tpu.memory_space<vmem>>, %arg6: memref<2x32xf32, #tpu.memory_space<vmem>>, %arg7: memref<2x32xf32, #tpu.memory_space<vmem>>) attributes {dimension_semantics = [#tpu.dimension_semantics<parallel>, #tpu.dimension_semantics<parallel>, #tpu.dimension_semantics<arbitrary>], iteration_bounds = array<i64: 1, 1, 1>, scalar_prefetch = 0 : i64, scratch_operands = 1 : i64, tpu.core_type = #tpu.core_type<tc>, window_params = [{transform_indices = @transform_0, window_bounds = array<i64: 2, 8, 32>}, {transform_indices = @transform_1, window_bounds = array<i64: 2, 8, 1>}, {transform_indices = @transform_2, window_bounds = array<i64: 2, 1>}, {transform_indices = @transform_3, window_bounds = array<i64: 2, 32>}]} {
    %c0_i32 = arith.constant 0 : i32
    %0 = arith.cmpi eq, %arg2, %c0_i32 : i32
    %1 = arith.extui %0 : i1 to i32
    %c0_i32_0 = arith.constant 0 : i32
    %2 = arith.cmpi ne, %1, %c0_i32_0 : i32
    scf.if %2 {
      %cst_12 = arith.constant 0.000000e+00 : f32
      %14 = vector.broadcast %cst_12 : f32 to vector<2x32xf32>
      %c0_13 = arith.constant 0 : index
      %c0_14 = arith.constant 0 : index
      %15 = vector.load %arg7[%c0_13, %c0_14] : memref<2x32xf32, #tpu.memory_space<vmem>>, vector<2x32xf32>
      tpu.vector_store %arg7[%c0_13, %c0_14], %14 {strides = array<i32>} : memref<2x32xf32, #tpu.memory_space<vmem>>, vector<2x32xf32>,
    } else {
    }
    %c0 = arith.constant 0 : index
    %c0_1 = arith.constant 0 : index
    %3 = vector.load %arg7[%c0, %c0_1] : memref<2x32xf32, #tpu.memory_space<vmem>>, vector<2x32xf32>
    %c0_2 = arith.constant 0 : index
    %c0_3 = arith.constant 0 : index
    %c0_4 = arith.constant 0 : index
    %4 = vector.load %arg3[%c0_2, %c0_3, %c0_4] : memref<2x8x32xf32, #tpu.memory_space<vmem>>, vector<2x8x32xf32>
    %c0_5 = arith.constant 0 : index
    %c0_6 = arith.constant 0 : index
    %c0_7 = arith.constant 0 : index
    %5 = vector.load %arg4[%c0_5, %c0_6, %c0_7] : memref<2x8x1xf32, #tpu.memory_space<vmem>>, vector<2x8x1xf32>
    %6 = vector.broadcast %5 : vector<2x8x1xf32> to vector<2x8x32xf32>
    %7 = arith.mulf %4, %6 : vector<2x8x32xf32>
    %cst = arith.constant dense<0.000000e+00> : vector<2x32xf32>
    %8 = vector.multi_reduction <add>, %7, %cst [1] : vector<2x8x32xf32> to vector<2x32xf32>
    %9 = arith.addf %3, %8 : vector<2x32xf32>
    %c0_8 = arith.constant 0 : index
    %c0_9 = arith.constant 0 : index
    %10 = vector.load %arg7[%c0_8, %c0_9] : memref<2x32xf32, #tpu.memory_space<vmem>>, vector<2x32xf32>
    tpu.vector_store %arg7[%c0_8, %c0_9], %9 {strides = array<i32>} : memref<2x32xf32, #tpu.memory_space<vmem>>, vector<2x32xf32>,
    %c0_i32_10 = arith.constant 0 : i32
    %11 = arith.cmpi eq, %arg2, %c0_i32_10 : i32
    %12 = arith.extui %11 : i1 to i32
    %c0_i32_11 = arith.constant 0 : i32
    %13 = arith.cmpi ne, %12, %c0_i32_11 : i32
    scf.if %13 {
      %c0_12 = arith.constant 0 : index
      %c0_13 = arith.constant 0 : index
      %14 = vector.load %arg7[%c0_12, %c0_13] : memref<2x32xf32, #tpu.memory_space<vmem>>, vector<2x32xf32>
      %c0_14 = arith.constant 0 : index
      %c0_15 = arith.constant 0 : index
      %15 = vector.load %arg5[%c0_14, %c0_15] : memref<2x1xf32, #tpu.memory_space<vmem>>, vector<2x1xf32>
      %16 = vector.broadcast %15 : vector<2x1xf32> to vector<2x32xf32>
      %17 = arith.mulf %14, %16 : vector<2x32xf32>
      %c0_16 = arith.constant 0 : index
      %c0_17 = arith.constant 0 : index
      %18 = vector.load %arg6[%c0_16, %c0_17] : memref<2x32xf32, #tpu.memory_space<vmem>>, vector<2x32xf32>
      tpu.vector_store %arg6[%c0_16, %c0_17], %17 {strides = array<i32>} : memref<2x32xf32, #tpu.memory_space<vmem>>, vector<2x32xf32>,
    } else {
    }
    return
  }
  func.func @transform_0(%arg0: i32, %arg1: i32, %arg2: i32) -> (i32, i32, i32) {
    %c0_i32 = arith.constant 0 : i32
    return %arg0, %arg2, %arg1 : i32, i32, i32
  }
  func.func @transform_1(%arg0: i32, %arg1: i32, %arg2: i32) -> (i32, i32, i32) {
    %c0_i32 = arith.constant 0 : i32
    %c0_i32_0 = arith.constant 0 : i32
    return %arg0, %arg2, %c0_i32 : i32, i32, i32
  }
  func.func @transform_2(%arg0: i32, %arg1: i32, %arg2: i32) -> (i32, i32) {
    %c0_i32 = arith.constant 0 : i32
    %c0_i32_0 = arith.constant 0 : i32
    return %arg0, %c0_i32 : i32, i32
  }
  func.func @transform_3(%arg0: i32, %arg1: i32, %arg2: i32) -> (i32, i32) {
    %c0_i32 = arith.constant 0 : i32
    return %arg0, %arg1 : i32, i32
  }
}

</mosaic_0001>

<llo_original>
// kernel: tpu_custom_call.1
$region0: #{tpu_custom_call.1}
  #allocation0 [shape = 'u32[]', space=smem, size = 0x4, offset = 0x4, fixed_abs, tag = 'smem constant byte address 0x4 - core index']
  #allocation1 [shape = 'u32[144,128]{1,0:T(1,128)}', space=vmem, size = 0x12000, scoped, tag = 'internal scratch']
  #allocation2 [shape = 'f32[2,32]{1,0:T(2,128)}', space=vmem, size = 0x400, scoped, tag = 'scratch operand']
  %s0 = inlined_call_operand.vmem [shape: f32[2,8,32], index: 0, kind: input, shape index: {}]
  %s1 = inlined_call_operand.vmem [shape: f32[2,8,1], index: 1, kind: input, shape index: {}]
  %s2 = inlined_call_operand.vmem [shape: f32[2,1], index: 2, kind: input, shape index: {}]
  %s3 = inlined_call_operand.hbm [shape: f32[2,32], index: 3, kind: output, shape index: {}]
  %s4 = sld [smem:[#allocation0]]
  $region30: #{tpu_custom_call.1} parent=0
    _
  %s6 = ssub.s32 1, %s4
  %s7 = scalar_select 0, %s6, %s4
  $region1: #{tpu_custom_call.1} parent=0
    #allocation3 [shape = 'u8[1024]{0}', space=vmem, size = 0x400, scoped, tag = 'output window, operand 0, single buffered']
    #allocation4 [shape = 's32[1]{0}', space=sflag, size = 0x4, scoped, tag = 'scoped memory for tpu_custom_call.1']
    %8 = vsyncpa [#allocation4], 0
    // Predicated region
    $region2: #{tpu_custom_call.1} parent=1 // pred_check
      _
    $region3: #{tpu_custom_call.1} parent=1 // pred_check_branch
      %10 = sbr.rel (0) target = $region5
    $region4: #{tpu_custom_call.1} parent=1 // pred_region
      _
    $region5: #{tpu_custom_call.1} parent=1 // pred_fallthru
      _
    // Predicated region
    $region6: #{tpu_custom_call.1} parent=1 // pred_check
      _
    $region7: #{tpu_custom_call.1} parent=1 // pred_check_branch
      %12 = sbr.rel (0) target = $region9
    $region8: #{tpu_custom_call.1} parent=1 // pred_region
      _
    $region9: #{tpu_custom_call.1} parent=1 // pred_fallthru
      _
    // Predicated region
    $region10: #{tpu_custom_call.1} parent=1 // pred_check
      _
    $region11: #{tpu_custom_call.1} parent=1 // pred_check_branch
      %14 = sbr.rel (0) target = $region13
    $region12: #{tpu_custom_call.1} parent=1 // pred_region
      _
    $region13: #{tpu_custom_call.1} parent=1 // pred_fallthru
      _
    %p15 = scmp.eq.s32.totalorder 0, 0
    // Predicated region
    $region14: #{tpu_custom_call.1} parent=1 // pred_check
      %p16 = pneg %p15
    $region15: #{tpu_custom_call.1} parent=1 // pred_check_branch
      %18 = sbr.rel (%p16) target = $region17
    $region16: #{tpu_custom_call.1} parent=1 // pred_region
      %vm19 = vcmask 254976
      %20 = vst.msk [vmem:[#allocation2] sm:$0x3] %vm19, 0.0
    $region17: #{tpu_custom_call.1} parent=1 // pred_fallthru
      _
    %v21 = vld [vmem:[#allocation2] sm:$0x3]
    %v22 = vld [vmem:[%s0] sm:$0xff]
    %v23 = vld [vmem:[%s0 + $0x8] sm:$0xff]
    %v24 = vld [vmem:[%s1] sm:$0xff]
    %v25 = vld [vmem:[%s1 + $0x8] sm:$0xff]
    %27 = vset.pattern.permute.xlu0 0
    %28 = vperm.xlu0 %27, %v24
    %v29 = vpop.permute.xlu0 %28
    %32 = vset.pattern.permute.xlu0 0
    %33 = vperm.xlu0 %32, %v25
    %v34 = vpop.permute.xlu0 %33
    %v36 = vmul.f32 %v22, %v29
    %v37 = vmul.f32 %v23, %v34
    %vm38 = vcmask 261120
    %v39 = vsel %vm38, %v36, 0.0
    %v40 = vrot.slane %v39, 4
    %v41 = vadd.f32 %v39, %v40
    %v42 = vrot.slane %v41, 2
    %v43 = vadd.f32 %v41, %v42
    %v44 = vrot.slane %v43, 1
    %v45 = vadd.f32 %v43, %v44
    %v46 = vsel %vm38, %v37, 0.0
    %v47 = vrot.slane %v46, 4
    %v48 = vadd.f32 %v46, %v47
    %v49 = vrot.slane %v48, 2
    %v50 = vadd.f32 %v48, %v49
    %v51 = vrot.slane %v50, 1
    %v52 = vadd.f32 %v50, %v51
    %vm55 = vcmask 1041409
    %v56 = vsel %vm55, %v52, %v45
    %v58 = vadd.f32 %v21, %v56
    %vm59 = vcmask 254976
    %60 = vst.msk [vmem:[#allocation2] sm:$0x3] %vm59, %v58
    // Predicated region
    $region18: #{tpu_custom_call.1} parent=1 // pred_check
      %p61 = pneg %p15
    $region19: #{tpu_custom_call.1} parent=1 // pred_check_branch
      %63 = sbr.rel (%p61) target = $region21
    $region20: #{tpu_custom_call.1} parent=1 // pred_region
      %v64 = vld [vmem:[#allocation2] sm:$0x3]
      %v65 = vld [vmem:[%s2] sm:$0x3]
      %67 = vset.pattern.permute.xlu0 0
      %68 = vperm.xlu0 %67, %v65
      %v69 = vpop.permute.xlu0 %68
      %v71 = vmul.f32 %v64, %v69
      %72 = vst.msk [vmem:[#allocation3] sm:$0x3] %vm59, %v71
    $region21: #{tpu_custom_call.1} parent=1 // pred_fallthru
      _
    // Predicated region
    $region22: #{tpu_custom_call.1} parent=1 // pred_check
      _
    $region23: #{tpu_custom_call.1} parent=1 // pred_check_branch
      %74 = sbr.rel (0) target = $region25
    $region24: #{tpu_custom_call.1} parent=1 // pred_region
      %s76 = ssub.s32 32, 32
      %77 = vsyncadd [#allocation4], %s76
      %s79 = sshll.u32 [#allocation3], 4
      %s80 = int_to_ptr.vmem [resolvable:$true] %s79
      %82 = dma.vmem_to_hbm [thread:$0]  %s80, 32, %s3, [#allocation4]
    $region25: #{tpu_custom_call.1} parent=1 // pred_fallthru
      _
    // Predicated region
    $region26: #{tpu_custom_call.1} parent=1 // pred_check
      _
    $region27: #{tpu_custom_call.1} parent=1 // pred_check_branch
      %84 = sbr.rel (0) target = $region29
    $region28: #{tpu_custom_call.1} parent=1 // pred_region
      %85 = dma.done [#allocation4], 32
    $region29: #{tpu_custom_call.1} parent=1 // pred_fallthru
      _
    %86 = vsyncpa [#allocation4], 1

</llo_original>
